<compile_context>
chip_gen: v6e
topology: v6e:2x2x1
jax: 0.10.0
libtpu: 0.0.40
codegen_flags: <defaults>
</compile_context>

<pallas_src>
import jax
import jax.numpy as jnp
from jax.experimental import pallas as pl
from jax.experimental.pallas import tpu as pltpu


def _round_up(n, m):
    return ((n + m - 1) // m) * m


def _dnn_kernel(x_ref,
                w1_ref, b1_ref,
                w2_ref, b2_ref,
                w3_ref, b3_ref,
                w4_ref, b4_ref,
                o_ref):
    # One batch tile per grid step.  Weights/biases are VMEM-resident (constant
    # index maps); x / o are the streamed, double-buffered tiles.
    x = x_ref[...]

    h = jnp.dot(x, w1_ref[...], preferred_element_type=jnp.float32) + b1_ref[...]
    h = jnp.maximum(h, 0.0)

    h = jnp.dot(h.astype(w2_ref.dtype), w2_ref[...],
                preferred_element_type=jnp.float32) + b2_ref[...]
    h = jnp.maximum(h, 0.0)

    h = jnp.dot(h.astype(w3_ref.dtype), w3_ref[...],
                preferred_element_type=jnp.float32) + b3_ref[...]
    h = jnp.maximum(h, 0.0)

    # Final layer (K=16, N=1): a 1-wide MXU matmul occupies 1/256 of the MXU and
    # still pays a full result-FIFO drain; do it on the VPU + a 16-lane XLU
    # reduce instead.  w4 arrives pre-reshaped to (1, 16).
    out = jnp.sum(h * w4_ref[...].astype(jnp.float32), axis=-1, keepdims=True)
    out = out + b4_ref[...]
    o_ref[...] = out.astype(o_ref.dtype)


def dnn_forward(x, params, *, tile_b=2048, compute_dtype=jnp.float32):
    """params: list of (W, b) with W shaped (in, out), b shaped (1, out)."""
    (w1, b1), (w2, b2), (w3, b3), (w4, b4) = params
    batch, input_dim = x.shape
    out_dim = w4.shape[1]

    # Pick the batch tile: keep it a multiple of 8 (sublanes) and don't exceed
    # the (rounded-up) batch for tiny inputs; then zero-pad batch to a multiple
    # of the tile so every grid step is a full, unmasked block.
    tile_b = min(tile_b, _round_up(batch, 8))
    padded = _round_up(batch, tile_b)
    if padded != batch:
        x = jnp.pad(x, ((0, padded - batch), (0, 0)))

    # Optional bf16 streaming (f32 accumulation via preferred_element_type;
    # bias adds / ReLU stay in f32, so it is also safe on v5e's f32-only VPU).
    if compute_dtype != x.dtype:
        x = x.astype(compute_dtype)
    w1c, w2c, w3c = (w.astype(compute_dtype) for w in (w1, w2, w3))
    w4_row = w4.reshape(1, w4.shape[0]).astype(compute_dtype)   # (1, 16)

    grid = (padded // tile_b,)

    x_spec = pl.BlockSpec((tile_b, input_dim), lambda i: (i, 0))
    out_spec = pl.BlockSpec((tile_b, out_dim), lambda i: (i, 0))

    def const_spec(arr):
        # Full-array block, same block every step -> stays resident in VMEM.
        return pl.BlockSpec(arr.shape, lambda i: (0, 0))

    out = pl.pallas_call(
        _dnn_kernel,
        out_shape=jax.ShapeDtypeStruct((padded, out_dim), jnp.float32),
        grid=grid,
        in_specs=[x_spec,
                  const_spec(w1c), const_spec(b1),
                  const_spec(w2c), const_spec(b2),
                  const_spec(w3c), const_spec(b3),
                  const_spec(w4_row), const_spec(b4)],
        out_specs=out_spec,
        compiler_params=pltpu.CompilerParams(
            dimension_semantics=("parallel",),   # megacore sharding on v7x
        ),
    )(x, w1c, b1, w2c, b2, w3c, b3, w4_row, b4)

    return out[:batch]


def init_params(key, input_dim):
    """Deterministic init mimicking PyTorch's default Linear init (U(-1/sqrt(fan_in), +))."""
    dims = [input_dim, 64, 32, 16, 1]
    params = []
    for i in range(4):
        fan_in, fan_out = dims[i], dims[i + 1]
        key, kw, kb = jax.random.split(key, 3)
        bound = 1.0 / jnp.sqrt(fan_in)
        # Stored already transposed: (in, out)
        w = jax.random.uniform(kw, (fan_in, fan_out), jnp.float32, -bound, bound)
        b = jax.random.uniform(kb, (1, fan_out), jnp.float32, -bound, bound)
        params.append((w, b))
    return params


def reference_forward(x, params):
    h = x
    for i, (w, b) in enumerate(params):
        h = h @ w + b
        if i < 3:
            h = jnp.maximum(h, 0.0)
    return h


if __name__ == "__main__":
    key = jax.random.PRNGKey(0)
    input_dim = 32

    kx, kp, kx2 = jax.random.split(key, 3)
    params = init_params(kp, input_dim)

    # 1) Small case matching the module spec (single tile, grid of 1).
    x_small = jax.random.normal(kx, (8, input_dim), jnp.float32)
    out_small = jax.block_until_ready(dnn_forward(x_small, params))
    ref_small = reference_forward(x_small, params)
    assert out_small.shape == (8, 1), out_small.shape
    assert jnp.allclose(out_small, ref_small, atol=1e-5, rtol=1e-5), \
        float(jnp.max(jnp.abs(out_small - ref_small)))

    # 2) Gridded case with a ragged batch (exercises padding + multi-step pipeline).
    x_big = jax.random.normal(kx2, (520, input_dim), jnp.float32)
    out_big = jax.block_until_ready(dnn_forward(x_big, params, tile_b=256))
    ref_big = reference_forward(x_big, params)
    assert out_big.shape == (520, 1), out_big.shape
    assert jnp.allclose(out_big, ref_big, atol=1e-5, rtol=1e-5), \
        float(jnp.max(jnp.abs(out_big - ref_big)))

    # 3) bf16 streaming path (halves HBM bytes for x; f32 accumulation).
    out_bf16 = jax.block_until_ready(
        dnn_forward(x_big, params, tile_b=256, compute_dtype=jnp.bfloat16))
    assert jnp.allclose(out_bf16, ref_big, atol=3e-2, rtol=3e-2), \
        float(jnp.max(jnp.abs(out_bf16 - ref_big)))

    print("KERNEL_OK")
</pallas_src>

<mosaic_0001>
module attributes {stable_mosaic.version = 11 : i64} {
  func.func @_dnn_kernel(%arg0: i32, %arg1: memref<8x32xf32, #tpu.memory_space<vmem>>, %arg2: memref<32x64xf32, #tpu.memory_space<vmem>>, %arg3: memref<1x64xf32, #tpu.memory_space<vmem>>, %arg4: memref<64x32xf32, #tpu.memory_space<vmem>>, %arg5: memref<1x32xf32, #tpu.memory_space<vmem>>, %arg6: memref<32x16xf32, #tpu.memory_space<vmem>>, %arg7: memref<1x16xf32, #tpu.memory_space<vmem>>, %arg8: memref<1x16xf32, #tpu.memory_space<vmem>>, %arg9: memref<1x1xf32, #tpu.memory_space<vmem>>, %arg10: memref<8x1xf32, #tpu.memory_space<vmem>>) attributes {dimension_semantics = [#tpu.dimension_semantics<parallel>], iteration_bounds = array<i64: 1>, scalar_prefetch = 0 : i64, scratch_operands = 0 : i64, tpu.core_type = #tpu.core_type<tc>, window_params = [{transform_indices = @transform_0, window_bounds = array<i64: 8, 32>}, {pipeline_mode = #tpu.pipeline_mode<synchronous>, transform_indices = @transform_1, window_bounds = array<i64: 32, 64>}, {pipeline_mode = #tpu.pipeline_mode<synchronous>, transform_indices = @transform_2, window_bounds = array<i64: 1, 64>}, {pipeline_mode = #tpu.pipeline_mode<synchronous>, transform_indices = @transform_3, window_bounds = array<i64: 64, 32>}, {pipeline_mode = #tpu.pipeline_mode<synchronous>, transform_indices = @transform_4, window_bounds = array<i64: 1, 32>}, {pipeline_mode = #tpu.pipeline_mode<synchronous>, transform_indices = @transform_5, window_bounds = array<i64: 32, 16>}, {pipeline_mode = #tpu.pipeline_mode<synchronous>, transform_indices = @transform_6, window_bounds = array<i64: 1, 16>}, {pipeline_mode = #tpu.pipeline_mode<synchronous>, transform_indices = @transform_7, window_bounds = array<i64: 1, 16>}, {pipeline_mode = #tpu.pipeline_mode<synchronous>, transform_indices = @transform_8, window_bounds = array<i64: 1, 1>}, {transform_indices = @transform_9, window_bounds = array<i64: 8, 1>}]} {
    %c0 = arith.constant 0 : index
    %c0_0 = arith.constant 0 : index
    %0 = vector.load %arg1[%c0, %c0_0] : memref<8x32xf32, #tpu.memory_space<vmem>>, vector<8x32xf32>
    %c0_1 = arith.constant 0 : index
    %c0_2 = arith.constant 0 : index
    %1 = vector.load %arg2[%c0_1, %c0_2] : memref<32x64xf32, #tpu.memory_space<vmem>>, vector<32x64xf32>
    %cst = arith.constant dense<0.000000e+00> : vector<8x64xf32>
    %2 = tpu.matmul %0, %1, %cst {dimension_numbers = #tpu.dot_dimension_numbers<[1], [0], [0], [1], [0, 0, 1, 1], [], []>} : vector<8x32xf32>, vector<32x64xf32>, vector<8x64xf32> -> vector<8x64xf32>
    %c0_3 = arith.constant 0 : index
    %c0_4 = arith.constant 0 : index
    %3 = vector.load %arg3[%c0_3, %c0_4] : memref<1x64xf32, #tpu.memory_space<vmem>>, vector<1x64xf32>
    %4 = vector.broadcast %3 : vector<1x64xf32> to vector<8x64xf32>
    %5 = arith.addf %2, %4 : vector<8x64xf32>
    %cst_5 = arith.constant 0.000000e+00 : f32
    %6 = vector.broadcast %cst_5 : f32 to vector<8x64xf32>
    %7 = arith.maximumf %5, %6 : vector<8x64xf32>
    %c0_6 = arith.constant 0 : index
    %c0_7 = arith.constant 0 : index
    %8 = vector.load %arg4[%c0_6, %c0_7] : memref<64x32xf32, #tpu.memory_space<vmem>>, vector<64x32xf32>
    %cst_8 = arith.constant dense<0.000000e+00> : vector<8x32xf32>
    %9 = tpu.matmul %7, %8, %cst_8 {dimension_numbers = #tpu.dot_dimension_numbers<[1], [0], [0], [1], [0, 0, 1, 1], [], []>} : vector<8x64xf32>, vector<64x32xf32>, vector<8x32xf32> -> vector<8x32xf32>
    %c0_9 = arith.constant 0 : index
    %c0_10 = arith.constant 0 : index
    %10 = vector.load %arg5[%c0_9, %c0_10] : memref<1x32xf32, #tpu.memory_space<vmem>>, vector<1x32xf32>
    %11 = vector.broadcast %10 : vector<1x32xf32> to vector<8x32xf32>
    %12 = arith.addf %9, %11 : vector<8x32xf32>
    %cst_11 = arith.constant 0.000000e+00 : f32
    %13 = vector.broadcast %cst_11 : f32 to vector<8x32xf32>
    %14 = arith.maximumf %12, %13 : vector<8x32xf32>
    %c0_12 = arith.constant 0 : index
    %c0_13 = arith.constant 0 : index
    %15 = vector.load %arg6[%c0_12, %c0_13] : memref<32x16xf32, #tpu.memory_space<vmem>>, vector<32x16xf32>
    %cst_14 = arith.constant dense<0.000000e+00> : vector<8x16xf32>
    %16 = tpu.matmul %14, %15, %cst_14 {dimension_numbers = #tpu.dot_dimension_numbers<[1], [0], [0], [1], [0, 0, 1, 1], [], []>} : vector<8x32xf32>, vector<32x16xf32>, vector<8x16xf32> -> vector<8x16xf32>
    %c0_15 = arith.constant 0 : index
    %c0_16 = arith.constant 0 : index
    %17 = vector.load %arg7[%c0_15, %c0_16] : memref<1x16xf32, #tpu.memory_space<vmem>>, vector<1x16xf32>
    %18 = vector.broadcast %17 : vector<1x16xf32> to vector<8x16xf32>
    %19 = arith.addf %16, %18 : vector<8x16xf32>
    %cst_17 = arith.constant 0.000000e+00 : f32
    %20 = vector.broadcast %cst_17 : f32 to vector<8x16xf32>
    %21 = arith.maximumf %19, %20 : vector<8x16xf32>
    %c0_18 = arith.constant 0 : index
    %c0_19 = arith.constant 0 : index
    %22 = vector.load %arg8[%c0_18, %c0_19] : memref<1x16xf32, #tpu.memory_space<vmem>>, vector<1x16xf32>
    %23 = vector.broadcast %22 : vector<1x16xf32> to vector<8x16xf32>
    %24 = arith.mulf %21, %23 : vector<8x16xf32>
    %cst_20 = arith.constant dense<0.000000e+00> : vector<8xf32>
    %25 = vector.multi_reduction <add>, %24, %cst_20 [1] : vector<8x16xf32> to vector<8xf32>
    %26 = vector.shape_cast %25 : vector<8xf32> to vector<8x1xf32>
    %c0_21 = arith.constant 0 : index
    %c0_22 = arith.constant 0 : index
    %27 = vector.load %arg9[%c0_21, %c0_22] : memref<1x1xf32, #tpu.memory_space<vmem>>, vector<1x1xf32>
    %28 = vector.broadcast %27 : vector<1x1xf32> to vector<8x1xf32>
    %29 = arith.addf %26, %28 : vector<8x1xf32>
    %c0_23 = arith.constant 0 : index
    %c0_24 = arith.constant 0 : index
    %30 = vector.load %arg10[%c0_23, %c0_24] : memref<8x1xf32, #tpu.memory_space<vmem>>, vector<8x1xf32>
    tpu.vector_store %arg10[%c0_23, %c0_24], %29 {strides = array<i32>} : memref<8x1xf32, #tpu.memory_space<vmem>>, vector<8x1xf32>,
    return
  }
  func.func @transform_0(%arg0: i32) -> (i32, i32) {
    %c0_i32 = arith.constant 0 : i32
    %c0_i32_0 = arith.constant 0 : i32
    return %arg0, %c0_i32 : i32, i32
  }
  func.func @transform_1(%arg0: i32) -> (i32, i32) {
    %c0_i32 = arith.constant 0 : i32
    %c0_i32_0 = arith.constant 0 : i32
    %c0_i32_1 = arith.constant 0 : i32
    return %c0_i32, %c0_i32_0 : i32, i32
  }
  func.func @transform_2(%arg0: i32) -> (i32, i32) {
    %c0_i32 = arith.constant 0 : i32
    %c0_i32_0 = arith.constant 0 : i32
    %c0_i32_1 = arith.constant 0 : i32
    return %c0_i32, %c0_i32_0 : i32, i32
  }
  func.func @transform_3(%arg0: i32) -> (i32, i32) {
    %c0_i32 = arith.constant 0 : i32
    %c0_i32_0 = arith.constant 0 : i32
    %c0_i32_1 = arith.constant 0 : i32
    return %c0_i32, %c0_i32_0 : i32, i32
  }
  func.func @transform_4(%arg0: i32) -> (i32, i32) {
    %c0_i32 = arith.constant 0 : i32
    %c0_i32_0 = arith.constant 0 : i32
    %c0_i32_1 = arith.constant 0 : i32
    return %c0_i32, %c0_i32_0 : i32, i32
  }
  func.func @transform_5(%arg0: i32) -> (i32, i32) {
    %c0_i32 = arith.constant 0 : i32
    %c0_i32_0 = arith.constant 0 : i32
    %c0_i32_1 = arith.constant 0 : i32
    return %c0_i32, %c0_i32_0 : i32, i32
  }
  func.func @transform_6(%arg0: i32) -> (i32, i32) {
    %c0_i32 = arith.constant 0 : i32
    %c0_i32_0 = arith.constant 0 : i32
    %c0_i32_1 = arith.constant 0 : i32
    return %c0_i32, %c0_i32_0 : i32, i32
  }
  func.func @transform_7(%arg0: i32) -> (i32, i32) {
    %c0_i32 = arith.constant 0 : i32
    %c0_i32_0 = arith.constant 0 : i32
    %c0_i32_1 = arith.constant 0 : i32
    return %c0_i32, %c0_i32_0 : i32, i32
  }
  func.func @transform_8(%arg0: i32) -> (i32, i32) {
    %c0_i32 = arith.constant 0 : i32
    %c0_i32_0 = arith.constant 0 : i32
    %c0_i32_1 = arith.constant 0 : i32
    return %c0_i32, %c0_i32_0 : i32, i32
  }
  func.func @transform_9(%arg0: i32) -> (i32, i32) {
    %c0_i32 = arith.constant 0 : i32
    %c0_i32_0 = arith.constant 0 : i32
    return %arg0, %c0_i32 : i32, i32
  }
}

</mosaic_0001>

<llo_original>
// kernel: tpu_custom_call.1
$region0: #{tpu_custom_call.1}
  #allocation0 [shape = 'u32[]', space=smem, size = 0x4, offset = 0x4, fixed_abs, tag = 'smem constant byte address 0x4 - core index']
  #allocation1 [shape = 'u32[144,128]{1,0:T(1,128)}', space=vmem, size = 0x12000, scoped, tag = 'internal scratch']
  #allocation2 [shape = 'f32[1,1]{1,0:T(1,128)S(1)}', space=vmem, size = 0x200, scoped, tag = 'scoped memory for tpu_custom_call.1']
  %s0 = inlined_call_operand.vmem [shape: f32[8,32], index: 0, kind: input, shape index: {}]
  %s1 = inlined_call_operand.vmem [shape: f32[32,64], index: 1, kind: input, shape index: {}]
  %s2 = inlined_call_operand.vmem [shape: f32[1,64], index: 2, kind: input, shape index: {}]
  %s3 = inlined_call_operand.vmem [shape: f32[64,32], index: 3, kind: input, shape index: {}]
  %s4 = inlined_call_operand.vmem [shape: f32[1,32], index: 4, kind: input, shape index: {}]
  %s5 = inlined_call_operand.vmem [shape: f32[32,16], index: 5, kind: input, shape index: {}]
  %s6 = inlined_call_operand.vmem [shape: f32[1,16], index: 6, kind: input, shape index: {}]
  %s7 = inlined_call_operand.vmem [shape: f32[1,16], index: 7, kind: input, shape index: {}]
  %s8 = inlined_call_operand.<no memory space> [shape: f32[1,1], index: 8, kind: input, shape index: {}]
  %s9 = inlined_call_operand.vmem [shape: f32[8,1], index: 9, kind: output, shape index: {}]
  %s10 = sld [smem:[#allocation0]]
  $region46: #{tpu_custom_call.1} parent=0
    _
  %s12 = ssub.s32 1, %s10
  %s13 = scalar_select 0, %s12, %s10
  %v14 = vstv %s8
  %15 = vst [vmem:[#allocation2] sm:$0x1] %v14
  // Predicated region
  $region2: #{tpu_custom_call.1} parent=0 // pred_check
    _
  $region3: #{tpu_custom_call.1} parent=0 // pred_check_branch
    %17 = sbr.rel (0) target = $region5
  $region4: #{tpu_custom_call.1} parent=0 // pred_region
    _
  $region5: #{tpu_custom_call.1} parent=0 // pred_fallthru
    _
  // Predicated region
  $region6: #{tpu_custom_call.1} parent=0 // pred_check
    _
  $region7: #{tpu_custom_call.1} parent=0 // pred_check_branch
    %19 = sbr.rel (0) target = $region9
  $region8: #{tpu_custom_call.1} parent=0 // pred_region
    _
  $region9: #{tpu_custom_call.1} parent=0 // pred_fallthru
    _
  // Predicated region
  $region10: #{tpu_custom_call.1} parent=0 // pred_check
    _
  $region11: #{tpu_custom_call.1} parent=0 // pred_check_branch
    %21 = sbr.rel (0) target = $region13
  $region12: #{tpu_custom_call.1} parent=0 // pred_region
    _
  $region13: #{tpu_custom_call.1} parent=0 // pred_fallthru
    _
  // Predicated region
  $region14: #{tpu_custom_call.1} parent=0 // pred_check
    _
  $region15: #{tpu_custom_call.1} parent=0 // pred_check_branch
    %23 = sbr.rel (0) target = $region17
  $region16: #{tpu_custom_call.1} parent=0 // pred_region
    _
  $region17: #{tpu_custom_call.1} parent=0 // pred_fallthru
    _
  // Predicated region
  $region18: #{tpu_custom_call.1} parent=0 // pred_check
    _
  $region19: #{tpu_custom_call.1} parent=0 // pred_check_branch
    %25 = sbr.rel (0) target = $region21
  $region20: #{tpu_custom_call.1} parent=0 // pred_region
    _
  $region21: #{tpu_custom_call.1} parent=0 // pred_fallthru
    _
  // Predicated region
  $region22: #{tpu_custom_call.1} parent=0 // pred_check
    _
  $region23: #{tpu_custom_call.1} parent=0 // pred_check_branch
    %27 = sbr.rel (0) target = $region25
  $region24: #{tpu_custom_call.1} parent=0 // pred_region
    _
  $region25: #{tpu_custom_call.1} parent=0 // pred_fallthru
    _
  // Predicated region
  $region26: #{tpu_custom_call.1} parent=0 // pred_check
    _
  $region27: #{tpu_custom_call.1} parent=0 // pred_check_branch
    %29 = sbr.rel (0) target = $region29
  $region28: #{tpu_custom_call.1} parent=0 // pred_region
    _
  $region29: #{tpu_custom_call.1} parent=0 // pred_fallthru
    _
  // Predicated region
  $region30: #{tpu_custom_call.1} parent=0 // pred_check
    _
  $region31: #{tpu_custom_call.1} parent=0 // pred_check_branch
    %31 = sbr.rel (0) target = $region33
  $region32: #{tpu_custom_call.1} parent=0 // pred_region
    _
  $region33: #{tpu_custom_call.1} parent=0 // pred_fallthru
    _
  // Predicated region
  $region34: #{tpu_custom_call.1} parent=0 // pred_check
    _
  $region35: #{tpu_custom_call.1} parent=0 // pred_check_branch
    %33 = sbr.rel (0) target = $region37
  $region36: #{tpu_custom_call.1} parent=0 // pred_region
    _
  $region37: #{tpu_custom_call.1} parent=0 // pred_fallthru
    _
  %v34 = vld [vmem:[%s0] sm:$0xff]
  %v35 = vld [vmem:[%s1] sm:$0xff]
  %v36 = vld [vmem:[%s1 + $0x8] sm:$0xff]
  %v37 = vld [vmem:[%s1 + $0x10] sm:$0xff]
  %v38 = vld [vmem:[%s1 + $0x18] sm:$0xff]
  %v39 = vld [vmem:[%s2] sm:$0x1]
  %v41 = vlaneseq
  %v42 = vshrl.u32 %v41, 7
  %v43 = vsub.s32 0, %v42
  %v44 = vrot.slane %v39, %v43
  %vm46 = vcmask 261120
  %v48 = vsel %vm46, %v34, 0
  %50 = vmatprep.subr.mxu0 0.0
  %51 = vmatpush1.msra.mxu0 0.0
  %52 = vmatprep.subr.mxu0 0.0
  %53 = vmatpush1.msra.mxu0 0.0
  %54 = vmatprep.subr.mxu0 0.0
  %55 = vmatpush1.msra.mxu0 0.0
  %56 = vmatprep.subr.mxu0 0.0
  %57 = vmatpush1.msra.mxu0 0.0
  %58 = vmatprep.subr.mxu0 0.0
  %59 = vmatpush1.msra.mxu0 0.0
  %60 = vmatprep.subr.mxu0 0.0
  %61 = vmatpush1.msra.mxu0 0.0
  %62 = vmatprep.subr.mxu0 0.0
  %63 = vmatpush1.msra.mxu0 0.0
  %64 = vmatprep.subr.mxu0 0.0
  %65 = vmatpush1.msra.mxu0 0.0
  %66 = vmatprep.subr.mxu0 0.0
  %67 = vmatpush1.msra.mxu0 0.0
  %68 = vmatprep.subr.mxu0 0.0
  %69 = vmatpush1.msra.mxu0 0.0
  %70 = vmatprep.subr.mxu0 0.0
  %71 = vmatpush1.msra.mxu0 0.0
  %72 = vmatprep.subr.mxu0 0.0
  %73 = vmatpush1.msra.mxu0 0.0
  %74 = vmatprep.subr.mxu0 0.0
  %75 = vmatpush1.msra.mxu0 %v38
  %76 = vmatprep.subr.mxu0 0.0
  %77 = vmatpush1.msra.mxu0 %v37
  %78 = vmatprep.subr.mxu0 0.0
  %79 = vmatpush1.msra.mxu0 %v36
  %80 = vmatprep.subr.mxu0 0.0
  %81 = vmatpush1.msra.mxu0 %v35
  %82 = vmatprep.subr.mxu0 0.0
  %83 = vmatpush2.msra.mxu0 0.0
  %84 = vmatprep.subr.mxu0 0.0
  %85 = vmatpush2.msra.mxu0 0.0
  %86 = vmatprep.subr.mxu0 0.0
  %87 = vmatpush2.msra.mxu0 0.0
  %88 = vmatprep.subr.mxu0 0.0
  %89 = vmatpush2.msra.mxu0 0.0
  %90 = vmatprep.subr.mxu0 0.0
  %91 = vmatpush2.msra.mxu0 0.0
  %92 = vmatprep.subr.mxu0 0.0
  %93 = vmatpush2.msra.mxu0 0.0
  %94 = vmatprep.subr.mxu0 0.0
  %95 = vmatpush2.msra.mxu0 0.0
  %96 = vmatprep.subr.mxu0 0.0
  %97 = vmatpush2.msra.mxu0 0.0
  %98 = vmatprep.subr.mxu0 0.0
  %99 = vmatpush2.msra.mxu0 0.0
  %100 = vmatprep.subr.mxu0 0.0
  %101 = vmatpush2.msra.mxu0 0.0
  %102 = vmatprep.subr.mxu0 0.0
  %103 = vmatpush2.msra.mxu0 0.0
  %104 = vmatprep.subr.mxu0 0.0
  %105 = vmatpush2.msra.mxu0 0.0
  %106 = vmatprep.subr.mxu0 0.0
  %107 = vmatpush2.msra.mxu0 0.0
  %108 = vmatprep.subr.mxu0 0.0
  %109 = vmatpush2.msra.mxu0 0.0
  %110 = vmatprep.subr.mxu0 0.0
  %111 = vmatpush2.msra.mxu0 0.0
  %112 = vmatprep.subr.mxu0 0.0
  %113 = vmatpush2.msra.mxu0 0.0
  %114 = vmatprep.mubr.f32.mxu0 0.0
  %115 = vmatmul.mubr.f32.gmra.mxu0 %v48
  %v116 = vpop.f32.mrf.mxu0
  %v117 = vadd.f32 %v44, %v116
  %v118 = vpop.f32.mrf.mxu0
  %119 = vdwg.mxu0
  %v120 = vmax.f32 %v117, 0.0
  %v121 = vld [vmem:[%s3] sm:$0xff]
  %v122 = vld [vmem:[%s3 + $0x8] sm:$0xff]
  %v123 = vld [vmem:[%s3 + $0x10] sm:$0xff]
  %v124 = vld [vmem:[%s3 + $0x18] sm:$0xff]
  %v125 = vld [vmem:[%s3 + $0x20] sm:$0xff]
  %v126 = vld [vmem:[%s3 + $0x28] sm:$0xff]
  %v127 = vld [vmem:[%s3 + $0x30] sm:$0xff]
  %v128 = vld [vmem:[%s3 + $0x38] sm:$0xff]
  %v129 = vld [vmem:[%s4] sm:$0x1]
  %v131 = vlaneseq
  %v132 = vshrl.u32 %v131, 7
  %v133 = vsub.s32 0, %v132
  %v134 = vrot.slane %v129, %v133
  %vm136 = vcmask 523264
  %v138 = vsel %vm136, %v120, 0
  %140 = vmatprep.subr.mxu0 0.0
  %141 = vmatpush1.msra.mxu0 0.0
  %142 = vmatprep.subr.mxu0 0.0
  %143 = vmatpush1.msra.mxu0 0.0
  %144 = vmatprep.subr.mxu0 0.0
  %145 = vmatpush1.msra.mxu0 0.0
  %146 = vmatprep.subr.mxu0 0.0
  %147 = vmatpush1.msra.mxu0 0.0
  %148 = vmatprep.subr.mxu0 0.0
  %149 = vmatpush1.msra.mxu0 0.0
  %150 = vmatprep.subr.mxu0 0.0
  %151 = vmatpush1.msra.mxu0 0.0
  %152 = vmatprep.subr.mxu0 0.0
  %153 = vmatpush1.msra.mxu0 0.0
  %154 = vmatprep.subr.mxu0 0.0
  %155 = vmatpush1.msra.mxu0 0.0
  %156 = vmatprep.subr.mxu0 0.0
  %157 = vmatpush1.msra.mxu0 %v128
  %158 = vmatprep.subr.mxu0 0.0
  %159 = vmatpush1.msra.mxu0 %v127
  %160 = vmatprep.subr.mxu0 0.0
  %161 = vmatpush1.msra.mxu0 %v126
  %162 = vmatprep.subr.mxu0 0.0
  %163 = vmatpush1.msra.mxu0 %v125
  %164 = vmatprep.subr.mxu0 0.0
  %165 = vmatpush1.msra.mxu0 %v124
  %166 = vmatprep.subr.mxu0 0.0
  %167 = vmatpush1.msra.mxu0 %v123
  %168 = vmatprep.subr.mxu0 0.0
  %169 = vmatpush1.msra.mxu0 %v122
  %170 = vmatprep.subr.mxu0 0.0
  %171 = vmatpush1.msra.mxu0 %v121
  %172 = vmatprep.subr.mxu0 0.0
  %173 = vmatpush2.msra.mxu0 0.0
  %174 = vmatprep.subr.mxu0 0.0
  %175 = vmatpush2.msra.mxu0 0.0
  %176 = vmatprep.subr.mxu0 0.0
  %177 = vmatpush2.msra.mxu0 0.0
  %178 = vmatprep.subr.mxu0 0.0
  %179 = vmatpush2.msra.mxu0 0.0
  %180 = vmatprep.subr.mxu0 0.0
  %181 = vmatpush2.msra.mxu0 0.0
  %182 = vmatprep.subr.mxu0 0.0
  %183 = vmatpush2.msra.mxu0 0.0
  %184 = vmatprep.subr.mxu0 0.0
  %185 = vmatpush2.msra.mxu0 0.0
  %186 = vmatprep.subr.mxu0 0.0
  %187 = vmatpush2.msra.mxu0 0.0
  %188 = vmatprep.subr.mxu0 0.0
  %189 = vmatpush2.msra.mxu0 0.0
  %190 = vmatprep.subr.mxu0 0.0
  %191 = vmatpush2.msra.mxu0 0.0
  %192 = vmatprep.subr.mxu0 0.0
  %193 = vmatpush2.msra.mxu0 0.0
  %194 = vmatprep.subr.mxu0 0.0
  %195 = vmatpush2.msra.mxu0 0.0
  %196 = vmatprep.subr.mxu0 0.0
  %197 = vmatpush2.msra.mxu0 0.0
  %198 = vmatprep.subr.mxu0 0.0
  %199 = vmatpush2.msra.mxu0 0.0
  %200 = vmatprep.subr.mxu0 0.0
  %201 = vmatpush2.msra.mxu0 0.0
  %202 = vmatprep.subr.mxu0 0.0
  %203 = vmatpush2.msra.mxu0 0.0
  %204 = vmatprep.mubr.f32.mxu0 0.0
  %205 = vmatmul.mubr.f32.gmra.mxu0 %v138
  %v206 = vpop.f32.mrf.mxu0
  %v207 = vadd.f32 %v134, %v206
  %v208 = vpop.f32.mrf.mxu0
  %209 = vdwg.mxu0
  %v210 = vmax.f32 %v207, 0.0
  %v211 = vld [vmem:[%s5] sm:$0xff]
  %v212 = vld [vmem:[%s5 + $0x8] sm:$0xff]
  %v213 = vld [vmem:[%s5 + $0x10] sm:$0xff]
  %v214 = vld [vmem:[%s5 + $0x18] sm:$0xff]
  %v215 = vld [vmem:[%s6] sm:$0x1]
  %v217 = vlaneseq
  %v218 = vshrl.u32 %v217, 7
  %v219 = vsub.s32 0, %v218
  %v220 = vrot.slane %v215, %v219
  %v223 = vsel %vm46, %v210, 0
  %225 = vmatprep.subr.mxu0 0.0
  %226 = vmatpush1.msra.mxu0 0.0
  %227 = vmatprep.subr.mxu0 0.0
  %228 = vmatpush1.msra.mxu0 0.0
  %229 = vmatprep.subr.mxu0 0.0
  %230 = vmatpush1.msra.mxu0 0.0
  %231 = vmatprep.subr.mxu0 0.0
  %232 = vmatpush1.msra.mxu0 0.0
  %233 = vmatprep.subr.mxu0 0.0
  %234 = vmatpush1.msra.mxu0 0.0
  %235 = vmatprep.subr.mxu0 0.0
  %236 = vmatpush1.msra.mxu0 0.0
  %237 = vmatprep.subr.mxu0 0.0
  %238 = vmatpush1.msra.mxu0 0.0
  %239 = vmatprep.subr.mxu0 0.0
  %240 = vmatpush1.msra.mxu0 0.0
  %241 = vmatprep.subr.mxu0 0.0
  %242 = vmatpush1.msra.mxu0 0.0
  %243 = vmatprep.subr.mxu0 0.0
  %244 = vmatpush1.msra.mxu0 0.0
  %245 = vmatprep.subr.mxu0 0.0
  %246 = vmatpush1.msra.mxu0 0.0
  %247 = vmatprep.subr.mxu0 0.0
  %248 = vmatpush1.msra.mxu0 0.0
  %249 = vmatprep.subr.mxu0 0.0
  %250 = vmatpush1.msra.mxu0 %v214
  %251 = vmatprep.subr.mxu0 0.0
  %252 = vmatpush1.msra.mxu0 %v213
  %253 = vmatprep.subr.mxu0 0.0
  %254 = vmatpush1.msra.mxu0 %v212
  %255 = vmatprep.subr.mxu0 0.0
  %256 = vmatpush1.msra.mxu0 %v211
  %257 = vmatprep.subr.mxu0 0.0
  %258 = vmatpush2.msra.mxu0 0.0
  %259 = vmatprep.subr.mxu0 0.0
  %260 = vmatpush2.msra.mxu0 0.0
  %261 = vmatprep.subr.mxu0 0.0
  %262 = vmatpush2.msra.mxu0 0.0
  %263 = vmatprep.subr.mxu0 0.0
  %264 = vmatpush2.msra.mxu0 0.0
  %265 = vmatprep.subr.mxu0 0.0
  %266 = vmatpush2.msra.mxu0 0.0
  %267 = vmatprep.subr.mxu0 0.0
  %268 = vmatpush2.msra.mxu0 0.0
  %269 = vmatprep.subr.mxu0 0.0
  %270 = vmatpush2.msra.mxu0 0.0
  %271 = vmatprep.subr.mxu0 0.0
  %272 = vmatpush2.msra.mxu0 0.0
  %273 = vmatprep.subr.mxu0 0.0
  %274 = vmatpush2.msra.mxu0 0.0
  %275 = vmatprep.subr.mxu0 0.0
  %276 = vmatpush2.msra.mxu0 0.0
  %277 = vmatprep.subr.mxu0 0.0
  %278 = vmatpush2.msra.mxu0 0.0
  %279 = vmatprep.subr.mxu0 0.0
  %280 = vmatpush2.msra.mxu0 0.0
  %281 = vmatprep.subr.mxu0 0.0
  %282 = vmatpush2.msra.mxu0 0.0
  %283 = vmatprep.subr.mxu0 0.0
  %284 = vmatpush2.msra.mxu0 0.0
  %285 = vmatprep.subr.mxu0 0.0
  %286 = vmatpush2.msra.mxu0 0.0
  %287 = vmatprep.subr.mxu0 0.0
  %288 = vmatpush2.msra.mxu0 0.0
  %289 = vmatprep.mubr.f32.mxu0 0.0
  %290 = vmatmul.mubr.f32.gmra.mxu0 %v223
  %v291 = vpop.f32.mrf.mxu0
  %v292 = vadd.f32 %v220, %v291
  %v293 = vpop.f32.mrf.mxu0
  %294 = vdwg.mxu0
  %v295 = vmax.f32 %v292, 0.0
  %v296 = vld [vmem:[%s7] sm:$0x1]
  %v298 = vlaneseq
  %v299 = vshrl.u32 %v298, 7
  %v300 = vsub.s32 0, %v299
  %v301 = vrot.slane %v296, %v300
  %v303 = vmul.f32 %v295, %v301
  %vm304 = vcmask 130048
  %v305 = vsel %vm304, %v303, 0.0
  %306 = vadd.xlane.f32.xlu0 %v305
  %v307 = vpop.xlane.xlu0 %306
  %v308 = vld [vmem:[#allocation2] sm:$0x1]
  %v310 = vlaneseq
  %v311 = vshrl.u32 %v310, 7
  %v312 = vsub.s32 0, %v311
  %v313 = vrot.slane %v308, %v312
  %v315 = vadd.f32 %v307, %v313
  %vm316 = vcmask 7168
  %317 = vst.msk [vmem:[%s9] sm:$0xff] %vm316, %v315
  // Predicated region
  $region38: #{tpu_custom_call.1} parent=0 // pred_check
    _
  $region39: #{tpu_custom_call.1} parent=0 // pred_check_branch
    %319 = sbr.rel (0) target = $region41
  $region40: #{tpu_custom_call.1} parent=0 // pred_region
    _
  $region41: #{tpu_custom_call.1} parent=0 // pred_fallthru
    _
  // Predicated region
  $region42: #{tpu_custom_call.1} parent=0 // pred_check
    _
  $region43: #{tpu_custom_call.1} parent=0 // pred_check_branch
    %321 = sbr.rel (0) target = $region45
  $region44: #{tpu_custom_call.1} parent=0 // pred_region
    _
  $region45: #{tpu_custom_call.1} parent=0 // pred_fallthru
    _

</llo_original>
